<compile_context>
chip_gen: v6e
topology: v6e:2x2x1
jax: 0.10.0
libtpu: 0.0.40
codegen_flags: <defaults>
</compile_context>

<pallas_src>
import jax
import jax.numpy as jnp
from jax.experimental import pallas as pl
from jax.experimental.pallas import tpu as pltpu

EPS = 1e-5
NEG_SLOPE = 0.2
LANE = 128
_W_SINGLE_BUF_BYTES = 2 * 1024 * 1024  # single-buffer the grid-invariant weight above this


def _round_up(x, m):
    return (x + m - 1) // m * m


# ----------------------------- kernels ---------------------------------------


def _stats_kernel(p_ref, w_ref, sum_ref, sq_ref):
    """Pass 1 (recompute path): conv tile on the MXU -> per-tile sum / sum-of-squares."""
    y = jnp.dot(p_ref[...], w_ref[...], preferred_element_type=jnp.float32)
    s = jnp.sum(y, axis=0, keepdims=True)
    q = jnp.sum(y * y, axis=0, keepdims=True)
    # (8, Cout_pad) blocks keep the sublane dim (8,128)-aligned; only row 0 is consumed.
    sum_ref[...] = jnp.broadcast_to(s, sum_ref.shape)
    sq_ref[...] = jnp.broadcast_to(q, sq_ref.shape)


def _conv_stats_kernel(p_ref, w_ref, y_ref, sum_ref, sq_ref):
    """Pass 1 (store-y path): conv tile, write bf16 y, and per-tile sum / sumsq."""
    y = jnp.dot(p_ref[...], w_ref[...], preferred_element_type=jnp.float32)
    y_ref[...] = y.astype(y_ref.dtype)
    s = jnp.sum(y, axis=0, keepdims=True)
    q = jnp.sum(y * y, axis=0, keepdims=True)
    sum_ref[...] = jnp.broadcast_to(s, sum_ref.shape)
    sq_ref[...] = jnp.broadcast_to(q, sq_ref.shape)


def _apply_recompute_kernel(p_ref, w_ref, scale_ref, shift_ref, o_ref):
    """Pass 2 (recompute path): redo the conv tile, apply pre-folded BN + LeakyReLU."""
    y = jnp.dot(p_ref[...], w_ref[...], preferred_element_type=jnp.float32)
    z = y * scale_ref[...] + shift_ref[...]
    o_ref[...] = jnp.where(z >= 0, z, NEG_SLOPE * z)


def _apply_stored_kernel(y_ref, scale_ref, shift_ref, o_ref):
    """Pass 2 (store-y path): read bf16 y, apply pre-folded BN + LeakyReLU."""
    z = y_ref[...].astype(jnp.float32) * scale_ref[...] + shift_ref[...]
    o_ref[...] = jnp.where(z >= 0, z, NEG_SLOPE * z)


# ----------------------------- tiling / folding helpers -----------------------


def _vmem_budget_bytes():
    """Per-generation VMEM budget for tile sizing (v5e/v6e: 128 MiB phys; v7x: 64 MiB)."""
    try:
        kind = jax.devices()[0].device_kind.lower()
    except Exception:
        kind = ""
    if ("v5" in kind) or ("v6" in kind):
        return 96 * 1024 * 1024
    return 44 * 1024 * 1024  # conservative: v7x (64 MiB physical) or unknown chip


def _choose_tiling(M, K_pad, Cout_pad, store_y):
    """Pick the largest M tile whose per-step footprint fits the VMEM budget."""
    budget = _vmem_budget_bytes()
    usable = int(budget * 0.8)  # headroom for compiler scratch / misc
    w_bytes = K_pad * Cout_pad * 2
    w_bufs = 1 if w_bytes >= _W_SINGLE_BUF_BYTES else 2

    def footprint(tm):
        f = 2 * tm * K_pad * 2            # bf16 patches stream, double-buffered
        f += w_bufs * w_bytes             # weight (single-buffered when large)
        f += 2 * tm * Cout_pad * 4        # f32 output stream (pass 2)
        if store_y:
            f += 2 * tm * Cout_pad * 2    # bf16 y stream (pass-1 write / pass-2 read)
        f += 4 * 8 * Cout_pad * 4         # per-tile stats blocks
        f += 4 * Cout_pad * 4             # scale / shift rows
        return f

    tm = 128
    for cand in (2048, 1536, 1024, 768, 512, 384, 256, 128):
        if footprint(cand) <= usable:
            tm = cand
            break
    tm = max(16, min(tm, _round_up(M, 16)))  # multiple of 16 (bf16 sublane packing)
    vmem_limit = int(min(budget, max(32 * 1024 * 1024, 2 * footprint(tm))))
    return tm, vmem_limit


def _weight_spec(K_pad, Cout_pad):
    if K_pad * Cout_pad * 2 >= _W_SINGLE_BUF_BYTES:
        # Grid-invariant block: single-buffer it to free VMEM for a larger M tile.
        # (Not exercised at the small demo shapes below.)
        return pl.BlockSpec((K_pad, Cout_pad), lambda i: (0, 0),
                            pipeline_mode=pl.Buffered(1))
    return pl.BlockSpec((K_pad, Cout_pad), lambda i: (0, 0))


def _fold_bn_scale_shift(tile_sum, tile_sq, counts, m_total, gamma_p, beta_p):
    """Chan-style combine of per-tile (sum, sumsq) partials -> folded BN scale/shift.

    Per-tile centered second moments are combined across tiles, avoiding the
    catastrophic cancellation of a single global E[y^2] - E[y]^2 at large M.
    """
    tile_mean = tile_sum / counts[:, None]                     # (T, Cp)
    m2 = tile_sq - tile_sum * tile_mean                        # per-tile centered SS
    mean = jnp.sum(tile_sum, axis=0) / m_total                 # (Cp,)
    var = (jnp.sum(m2, axis=0)
           + jnp.sum(counts[:, None] * (tile_mean - mean) ** 2, axis=0)) / m_total
    var = jnp.maximum(var, 0.0)
    inv_std = jax.lax.rsqrt(var + EPS)
    scale = gamma_p * inv_std
    shift = beta_p - mean * scale
    return scale.reshape(1, -1), shift.reshape(1, -1)


# ----------------------------- wrapper ----------------------------------------


def im2col(x, kh, kw, stride, pad):
    # x: (N, C, H, W) -> (N*OH*OW, C*KH*KW); K order (C, KH, KW) matches
    # torch weight.reshape(Cout, Cin*KH*KW). Built in bf16 so the materialized
    # patches matrix (and its padded copy) carries half the HBM bytes.
    N, C, H, W = x.shape
    xp = jnp.pad(x, ((0, 0), (0, 0), (pad, pad), (pad, pad)))
    OH = (H + 2 * pad - kh) // stride + 1
    OW = (W + 2 * pad - kw) // stride + 1
    cols = []
    for i in range(kh):
        for j in range(kw):
            cols.append(xp[:, :, i:i + stride * OH:stride, j:j + stride * OW:stride])
    patches = jnp.stack(cols, axis=2)                              # (N, C, KH*KW, OH, OW)
    patches = patches.transpose(0, 3, 4, 1, 2).reshape(N * OH * OW, C * kh * kw)
    return patches, OH, OW


def conv_relu_forward(x, weight, gamma, beta, *, stride=2, padding=1):
    """x: (N, Cin, H, W) NCHW; weight: (Cout, Cin, KH, KW). Returns NCHW float32."""
    N, Cin, H, W = x.shape
    Cout, _, KH, KW = weight.shape

    # TODO(synk): fuse im2col into the kernel (halo DMA of padded NHWC input) to remove
    # the patches blow-up entirely; kept in XLA (bf16) for now.
    patches, OH, OW = im2col(x.astype(jnp.bfloat16), KH, KW, stride, padding)
    M, K = patches.shape

    K_pad = _round_up(K, LANE)
    # 256-align the output/lane dim on wide layers (256-wide v6e/v7x MXU).
    Cout_pad = _round_up(Cout, 256 if Cout > LANE else LANE)

    # Store bf16 y between the passes when that is cheaper than re-reading the
    # patches and redoing the matmul in pass 2.
    store_y = K_pad > 2 * Cout_pad

    tm, vmem_limit = _choose_tiling(M, K_pad, Cout_pad, store_y)
    M_pad = _round_up(M, tm)
    n_tiles = M_pad // tm

    # Zero-padded, lane-dense bf16 MXU operands (zero rows/cols are stats-neutral:
    # they contribute 0 to sum/sumsq and the true per-tile counts are used below).
    p = jnp.pad(patches, ((0, M_pad - M), (0, K_pad - K)))
    wmat = weight.reshape(Cout, Cin * KH * KW).T.astype(jnp.bfloat16)       # (K, Cout)
    wp = jnp.pad(wmat, ((0, K_pad - K), (0, Cout_pad - Cout)))
    gp = jnp.pad(gamma.astype(jnp.float32), (0, Cout_pad - Cout))
    bp = jnp.pad(beta.astype(jnp.float32), (0, Cout_pad - Cout))

    p_spec = pl.BlockSpec((tm, K_pad), lambda i: (i, 0))
    w_spec = _weight_spec(K_pad, Cout_pad)
    out_spec = pl.BlockSpec((tm, Cout_pad), lambda i: (i, 0))
    stats_spec = pl.BlockSpec((8, Cout_pad), lambda i: (i, 0))
    vec_spec = pl.BlockSpec((1, Cout_pad), lambda i: (0, 0))
    stats_shape = jax.ShapeDtypeStruct((n_tiles * 8, Cout_pad), jnp.float32)

    # Every grid step writes its own output blocks (stats are per-tile), so both
    # passes are "parallel" and can be split across v7x's two TensorCores.
    cparams = pltpu.CompilerParams(
        dimension_semantics=("parallel",), vmem_limit_bytes=vmem_limit)

    matmul_flops = 2 * M_pad * K_pad * Cout_pad
    bytes_p = M_pad * K_pad * 2
    bytes_w = K_pad * Cout_pad * 2
    bytes_y16 = M_pad * Cout_pad * 2
    bytes_out = M_pad * Cout_pad * 4
    bytes_stats = 2 * n_tiles * 8 * Cout_pad * 4

    # ---- pass 1: conv (+ optional bf16 y writeback) + per-tile stats ----------
    if store_y:
        y16, sum8, sq8 = pl.pallas_call(
            _conv_stats_kernel,
            out_shape=(jax.ShapeDtypeStruct((M_pad, Cout_pad), jnp.bfloat16),
                       stats_shape, stats_shape),
            grid_spec=pltpu.PrefetchScalarGridSpec(
                num_scalar_prefetch=0, grid=(n_tiles,),
                in_specs=[p_spec, w_spec],
                out_specs=(out_spec, stats_spec, stats_spec)),
            compiler_params=cparams,
            cost_estimate=pl.CostEstimate(
                flops=matmul_flops, transcendentals=0,
                bytes_accessed=bytes_p + bytes_w + bytes_y16 + bytes_stats),
        )(p, wp)
    else:
        y16 = None
        sum8, sq8 = pl.pallas_call(
            _stats_kernel,
            out_shape=(stats_shape, stats_shape),
            grid_spec=pltpu.PrefetchScalarGridSpec(
                num_scalar_prefetch=0, grid=(n_tiles,),
                in_specs=[p_spec, w_spec],
                out_specs=(stats_spec, stats_spec)),
            compiler_params=cparams,
            cost_estimate=pl.CostEstimate(
                flops=matmul_flops, transcendentals=0,
                bytes_accessed=bytes_p + bytes_w + bytes_stats),
        )(p, wp)

    # ---- fold BN into per-channel scale/shift once (tiny XLA op) --------------
    tile_sum = sum8.reshape(n_tiles, 8, Cout_pad)[:, 0, :]
    tile_sq = sq8.reshape(n_tiles, 8, Cout_pad)[:, 0, :]
    counts = jnp.minimum(tm, M - jnp.arange(n_tiles) * tm).astype(jnp.float32)
    scale, shift = _fold_bn_scale_shift(tile_sum, tile_sq, counts, float(M), gp, bp)

    # ---- pass 2: apply folded BN + LeakyReLU ----------------------------------
    if store_y:
        out = pl.pallas_call(
            _apply_stored_kernel,
            out_shape=jax.ShapeDtypeStruct((M_pad, Cout_pad), jnp.float32),
            grid_spec=pltpu.PrefetchScalarGridSpec(
                num_scalar_prefetch=0, grid=(n_tiles,),
                in_specs=[out_spec, vec_spec, vec_spec],
                out_specs=out_spec),
            compiler_params=cparams,
            cost_estimate=pl.CostEstimate(
                flops=4 * M_pad * Cout_pad, transcendentals=0,
                bytes_accessed=bytes_y16 + bytes_out + 4 * Cout_pad * 4),
        )(y16, scale, shift)
    else:
        out = pl.pallas_call(
            _apply_recompute_kernel,
            out_shape=jax.ShapeDtypeStruct((M_pad, Cout_pad), jnp.float32),
            grid_spec=pltpu.PrefetchScalarGridSpec(
                num_scalar_prefetch=0, grid=(n_tiles,),
                in_specs=[p_spec, w_spec, vec_spec, vec_spec],
                out_specs=out_spec),
            compiler_params=cparams,
            cost_estimate=pl.CostEstimate(
                flops=matmul_flops + 4 * M_pad * Cout_pad, transcendentals=0,
                bytes_accessed=bytes_p + bytes_w + bytes_out + 4 * Cout_pad * 4),
        )(p, wp, scale, shift)

    # TODO(synk): a consumer that accepts NHWC (or bf16) could skip this full-tensor
    # transpose / halve its bytes; NCHW f32 kept for parity with the PyTorch module.
    return out[:M, :Cout].reshape(N, OH, OW, Cout).transpose(0, 3, 1, 2)


# ----------------------------- reference & test -------------------------------


def reference_forward(x, weight, gamma, beta, *, stride=2, padding=1):
    y = jax.lax.conv_general_dilated(
        x, weight, window_strides=(stride, stride),
        padding=((padding, padding), (padding, padding)),
        dimension_numbers=("NCHW", "OIHW", "NCHW"))
    mean = y.mean(axis=(0, 2, 3), keepdims=True)
    var = ((y - mean) ** 2).mean(axis=(0, 2, 3), keepdims=True)
    yn = (y - mean) / jnp.sqrt(var + EPS)
    yn = yn * gamma.reshape(1, -1, 1, 1) + beta.reshape(1, -1, 1, 1)
    return jnp.where(yn >= 0, yn, NEG_SLOPE * yn)


def _run_case(key, N, Cin, H, W, Cout, KH, KW, atol):
    k_x, k_w = jax.random.split(key)
    x = jax.random.normal(k_x, (N, Cin, H, W), dtype=jnp.float32)
    # Conv2d-style scaled-uniform init, bias=False in the module.
    fan_in = Cin * KH * KW
    weight = jax.random.uniform(k_w, (Cout, Cin, KH, KW), dtype=jnp.float32,
                                minval=-1.0, maxval=1.0) / jnp.sqrt(fan_in)
    # BatchNorm2d fresh-init affine params.
    gamma = jnp.ones((Cout,), dtype=jnp.float32)
    beta = jnp.zeros((Cout,), dtype=jnp.float32)

    out = jax.block_until_ready(conv_relu_forward(x, weight, gamma, beta))
    ref = reference_forward(x, weight, gamma, beta)
    assert out.shape == (N, Cout, H // 2, W // 2), out.shape
    err = float(jnp.max(jnp.abs(out - ref)))
    # bf16 MXU inputs vs f32 reference: allow small absolute error on O(1) outputs.
    assert jnp.allclose(out, ref, atol=atol, rtol=2e-2), err


if __name__ == "__main__":
    key = jax.random.PRNGKey(0)
    k1, k2 = jax.random.split(key)
    # Case 1 (Cin=4):  K_pad <= 2*Cout_pad -> pass 2 recomputes the conv tile.
    _run_case(k1, N=2, Cin=4, H=16, W=16, Cout=8, KH=4, KW=4, atol=2e-2)
    # Case 2 (Cin=32): K_pad >  2*Cout_pad -> pass 1 stores bf16 y, pass 2 is BN-only.
    # Slightly looser atol: y is additionally bf16-rounded between the two passes.
    _run_case(k2, N=2, Cin=32, H=16, W=16, Cout=8, KH=4, KW=4, atol=3e-2)
    print("KERNEL_OK")
</pallas_src>

<mosaic_0001>
module attributes {stable_mosaic.version = 11 : i64} {
  func.func @_stats_kernel(%arg0: i32, %arg1: memref<128x128xbf16, #tpu.memory_space<vmem>>, %arg2: memref<128x128xbf16, #tpu.memory_space<vmem>>, %arg3: memref<8x128xf32, #tpu.memory_space<vmem>>, %arg4: memref<8x128xf32, #tpu.memory_space<vmem>>) attributes {dimension_semantics = [#tpu.dimension_semantics<parallel>], iteration_bounds = array<i64: 1>, scalar_prefetch = 0 : i64, scratch_operands = 0 : i64, tpu.core_type = #tpu.core_type<tc>, window_params = [{transform_indices = @transform_0, window_bounds = array<i64: 128, 128>}, {pipeline_mode = #tpu.pipeline_mode<synchronous>, transform_indices = @transform_1, window_bounds = array<i64: 128, 128>}, {transform_indices = @transform_2, window_bounds = array<i64: 8, 128>}, {transform_indices = @transform_3, window_bounds = array<i64: 8, 128>}]} {
    %c0 = arith.constant 0 : index
    %c0_0 = arith.constant 0 : index
    %0 = vector.load %arg1[%c0, %c0_0] : memref<128x128xbf16, #tpu.memory_space<vmem>>, vector<128x128xbf16>
    %c0_1 = arith.constant 0 : index
    %c0_2 = arith.constant 0 : index
    %1 = vector.load %arg2[%c0_1, %c0_2] : memref<128x128xbf16, #tpu.memory_space<vmem>>, vector<128x128xbf16>
    %cst = arith.constant dense<0.000000e+00> : vector<128x128xf32>
    %2 = tpu.matmul %0, %1, %cst {dimension_numbers = #tpu.dot_dimension_numbers<[1], [0], [0], [1], [0, 0, 1, 1], [], []>} : vector<128x128xbf16>, vector<128x128xbf16>, vector<128x128xf32> -> vector<128x128xf32>
    %cst_3 = arith.constant dense<0.000000e+00> : vector<128xf32>
    %3 = vector.multi_reduction <add>, %2, %cst_3 [0] : vector<128x128xf32> to vector<128xf32>
    %4 = vector.shape_cast %3 : vector<128xf32> to vector<1x128xf32>
    %5 = arith.mulf %2, %2 : vector<128x128xf32>
    %cst_4 = arith.constant dense<0.000000e+00> : vector<128xf32>
    %6 = vector.multi_reduction <add>, %5, %cst_4 [0] : vector<128x128xf32> to vector<128xf32>
    %7 = vector.shape_cast %6 : vector<128xf32> to vector<1x128xf32>
    %8 = vector.shape_cast %4 : vector<1x128xf32> to vector<1x128xf32>
    %9 = vector.broadcast %8 : vector<1x128xf32> to vector<8x128xf32>
    %c0_5 = arith.constant 0 : index
    %c0_6 = arith.constant 0 : index
    %10 = vector.load %arg3[%c0_5, %c0_6] : memref<8x128xf32, #tpu.memory_space<vmem>>, vector<8x128xf32>
    tpu.vector_store %arg3[%c0_5, %c0_6], %9 {strides = array<i32>} : memref<8x128xf32, #tpu.memory_space<vmem>>, vector<8x128xf32>,
    %11 = vector.shape_cast %7 : vector<1x128xf32> to vector<1x128xf32>
    %12 = vector.broadcast %11 : vector<1x128xf32> to vector<8x128xf32>
    %c0_7 = arith.constant 0 : index
    %c0_8 = arith.constant 0 : index
    %13 = vector.load %arg4[%c0_7, %c0_8] : memref<8x128xf32, #tpu.memory_space<vmem>>, vector<8x128xf32>
    tpu.vector_store %arg4[%c0_7, %c0_8], %12 {strides = array<i32>} : memref<8x128xf32, #tpu.memory_space<vmem>>, vector<8x128xf32>,
    return
  }
  func.func @transform_0(%arg0: i32) -> (i32, i32) {
    %c0_i32 = arith.constant 0 : i32
    %c0_i32_0 = arith.constant 0 : i32
    return %arg0, %c0_i32 : i32, i32
  }
  func.func @transform_1(%arg0: i32) -> (i32, i32) {
    %c0_i32 = arith.constant 0 : i32
    %c0_i32_0 = arith.constant 0 : i32
    %c0_i32_1 = arith.constant 0 : i32
    return %c0_i32, %c0_i32_0 : i32, i32
  }
  func.func @transform_2(%arg0: i32) -> (i32, i32) {
    %c0_i32 = arith.constant 0 : i32
    %c0_i32_0 = arith.constant 0 : i32
    return %arg0, %c0_i32 : i32, i32
  }
  func.func @transform_3(%arg0: i32) -> (i32, i32) {
    %c0_i32 = arith.constant 0 : i32
    %c0_i32_0 = arith.constant 0 : i32
    return %arg0, %c0_i32 : i32, i32
  }
}

</mosaic_0001>

<llo_original>
// kernel: tpu_custom_call.1
$region0: #{tpu_custom_call.1}
  #allocation0 [shape = 'u32[]', space=smem, size = 0x4, offset = 0x4, fixed_abs, tag = 'smem constant byte address 0x4 - core index']
  #allocation1 [shape = 'u32[144,128]{1,0:T(1,128)}', space=vmem, size = 0x12000, scoped, tag = 'internal scratch']
  %s0 = inlined_call_operand.hbm [shape: bf16[128,128], index: 0, kind: input, shape index: {}]
  %s1 = inlined_call_operand.hbm [shape: bf16[128,128], index: 1, kind: input, shape index: {}]
  %s2 = inlined_call_operand.hbm [shape: f32[8,128], index: 2, kind: output, shape index: {0}]
  %s3 = inlined_call_operand.hbm [shape: f32[8,128], index: 3, kind: output, shape index: {1}]
  %4 = xla_tuple %s2, %s3
  %s5 = sld [smem:[#allocation0]]
  $region34: #{tpu_custom_call.1} parent=0
    _
  %s7 = ssub.s32 1, %s5
  %s8 = scalar_select 0, %s7, %s5
  $region1: #{tpu_custom_call.1} parent=0
    #allocation2 [shape = 'u8[32768]{0}', space=vmem, size = 0x8000, scoped, tag = 'input window, operand 0, single buffered']
    #allocation3 [shape = 's32[1]{0}', space=sflag, size = 0x4, scoped, tag = 'scoped memory for tpu_custom_call.1']
    #allocation4 [shape = 's32[1]{0}', space=sflag, size = 0x4, scoped, tag = 'scoped memory for tpu_custom_call.1']
    #allocation5 [shape = 'u8[32768]{0}', space=vmem, size = 0x8000, scoped, tag = 'input window, operand 1, single buffered']
    #allocation6 [shape = 's32[1]{0}', space=sflag, size = 0x4, scoped, tag = 'scoped memory for tpu_custom_call.1']
    #allocation7 [shape = 'u8[4096]{0}', space=vmem, size = 0x1000, scoped, tag = 'output window, operand 0, single buffered']
    #allocation8 [shape = 'u8[4096]{0}', space=vmem, size = 0x1000, scoped, tag = 'output window, operand 1, single buffered']
    #allocation9 [shape = 's32[1]{0}', space=sflag, size = 0x4, scoped, tag = 'scoped memory for tpu_custom_call.1']
    %9 = vsyncpa [#allocation3], 0
    %10 = vsyncpa [#allocation6], 0
    %11 = vsyncpa [#allocation4], 0
    %12 = vsyncpa [#allocation9], 0
    // Predicated region
    $region2: #{tpu_custom_call.1} parent=1 // pred_check
      _
    $region3: #{tpu_custom_call.1} parent=1 // pred_check_branch
      %14 = sbr.rel (0) target = $region5
    $region4: #{tpu_custom_call.1} parent=1 // pred_region
      %s16 = ssub.s32 1024, 1024
      %17 = vsyncadd [#allocation3], %s16
      %s18 = sshll.u32 [#allocation2], 4
      %s19 = int_to_ptr.vmem [resolvable:$true] %s18
      %24 = dma.hbm_to_vmem [thread:$0]  %s0, 1024, %s19, [#allocation3], 64, 64, 4
    $region5: #{tpu_custom_call.1} parent=1 // pred_fallthru
      _
    // Predicated region
    $region6: #{tpu_custom_call.1} parent=1 // pred_check
      _
    $region7: #{tpu_custom_call.1} parent=1 // pred_check_branch
      %26 = sbr.rel (0) target = $region9
    $region8: #{tpu_custom_call.1} parent=1 // pred_region
      %s28 = ssub.s32 1024, 1024
      %29 = vsyncadd [#allocation6], %s28
      %s30 = sshll.u32 [#allocation5], 4
      %s31 = int_to_ptr.vmem [resolvable:$true] %s30
      %36 = dma.hbm_to_vmem [thread:$0]  %s1, 1024, %s31, [#allocation6], 64, 64, 4
    $region9: #{tpu_custom_call.1} parent=1 // pred_fallthru
      _
    // Predicated region
    $region10: #{tpu_custom_call.1} parent=1 // pred_check
      _
    $region11: #{tpu_custom_call.1} parent=1 // pred_check_branch
      %38 = sbr.rel (0) target = $region13
    $region12: #{tpu_custom_call.1} parent=1 // pred_region
      %39 = dma.done [#allocation3], 1024
    $region13: #{tpu_custom_call.1} parent=1 // pred_fallthru
      _
    // Predicated region
    $region14: #{tpu_custom_call.1} parent=1 // pred_check
      _
    $region15: #{tpu_custom_call.1} parent=1 // pred_check_branch
      %41 = sbr.rel (0) target = $region17
    $region16: #{tpu_custom_call.1} parent=1 // pred_region
      %42 = dma.done [#allocation6], 1024
    $region17: #{tpu_custom_call.1} parent=1 // pred_fallthru
      _
    %v44 = vld [vmem:[#allocation2] sm:$0xf]
    %v45 = vld [vmem:[#allocation2 + $0x4] sm:$0xf]
    %v46 = vld [vmem:[#allocation2 + $0x8] sm:$0xf]
    %v47 = vld [vmem:[#allocation2 + $0xc] sm:$0xf]
    %v48 = vld [vmem:[#allocation2 + $0x10] sm:$0xf]
    %v49 = vld [vmem:[#allocation2 + $0x14] sm:$0xf]
    %v50 = vld [vmem:[#allocation2 + $0x18] sm:$0xf]
    %v51 = vld [vmem:[#allocation2 + $0x1c] sm:$0xf]
    %v52 = vld [vmem:[#allocation2 + $0x20] sm:$0xf]
    %v53 = vld [vmem:[#allocation2 + $0x24] sm:$0xf]
    %v54 = vld [vmem:[#allocation2 + $0x28] sm:$0xf]
    %v55 = vld [vmem:[#allocation2 + $0x2c] sm:$0xf]
    %v56 = vld [vmem:[#allocation2 + $0x30] sm:$0xf]
    %v57 = vld [vmem:[#allocation2 + $0x34] sm:$0xf]
    %v58 = vld [vmem:[#allocation2 + $0x38] sm:$0xf]
    %v59 = vld [vmem:[#allocation2 + $0x3c] sm:$0xf]
    %v60 = vld [vmem:[#allocation5] sm:$0xf]
    %v61 = vld [vmem:[#allocation5 + $0x4] sm:$0xf]
    %v62 = vld [vmem:[#allocation5 + $0x8] sm:$0xf]
    %v63 = vld [vmem:[#allocation5 + $0xc] sm:$0xf]
    %v64 = vld [vmem:[#allocation5 + $0x10] sm:$0xf]
    %v65 = vld [vmem:[#allocation5 + $0x14] sm:$0xf]
    %v66 = vld [vmem:[#allocation5 + $0x18] sm:$0xf]
    %v67 = vld [vmem:[#allocation5 + $0x1c] sm:$0xf]
    %v68 = vld [vmem:[#allocation5 + $0x20] sm:$0xf]
    %v69 = vld [vmem:[#allocation5 + $0x24] sm:$0xf]
    %v70 = vld [vmem:[#allocation5 + $0x28] sm:$0xf]
    %v71 = vld [vmem:[#allocation5 + $0x2c] sm:$0xf]
    %v72 = vld [vmem:[#allocation5 + $0x30] sm:$0xf]
    %v73 = vld [vmem:[#allocation5 + $0x34] sm:$0xf]
    %v74 = vld [vmem:[#allocation5 + $0x38] sm:$0xf]
    %v75 = vld [vmem:[#allocation5 + $0x3c] sm:$0xf]
    %v92 = vunpack.c.l.b16 %v44
    %v93 = vunpack.c.l.b16 %v45
    %v94 = vunpack.c.l.b16 %v46
    %v95 = vunpack.c.l.b16 %v47
    %v96 = vunpack.c.l.b16 %v48
    %v97 = vunpack.c.l.b16 %v49
    %v98 = vunpack.c.l.b16 %v50
    %v99 = vunpack.c.l.b16 %v51
    %v100 = vunpack.c.l.b16 %v52
    %v101 = vunpack.c.l.b16 %v53
    %v102 = vunpack.c.l.b16 %v54
    %v103 = vunpack.c.l.b16 %v55
    %v104 = vunpack.c.l.b16 %v56
    %v105 = vunpack.c.l.b16 %v57
    %v106 = vunpack.c.l.b16 %v58
    %v107 = vunpack.c.l.b16 %v59
    %v108 = vpack.c.b16 %v93, %v92
    %v109 = vpack.c.b16 %v95, %v94
    %v110 = vpack.c.b16 %v97, %v96
    %v111 = vpack.c.b16 %v99, %v98
    %v112 = vpack.c.b16 %v101, %v100
    %v113 = vpack.c.b16 %v103, %v102
    %v114 = vpack.c.b16 %v105, %v104
    %v115 = vpack.c.b16 %v107, %v106
    %v140 = vunpack.c.l.b16 %v60
    %v141 = vunpack.c.l.b16 %v61
    %v142 = vunpack.c.l.b16 %v62
    %v143 = vunpack.c.l.b16 %v63
    %v144 = vunpack.c.l.b16 %v64
    %v145 = vunpack.c.l.b16 %v65
    %v146 = vunpack.c.l.b16 %v66
    %v147 = vunpack.c.l.b16 %v67
    %v148 = vunpack.c.l.b16 %v68
    %v149 = vunpack.c.l.b16 %v69
    %v150 = vunpack.c.l.b16 %v70
    %v151 = vunpack.c.l.b16 %v71
    %v152 = vunpack.c.l.b16 %v72
    %v153 = vunpack.c.l.b16 %v73
    %v154 = vunpack.c.l.b16 %v74
    %v155 = vunpack.c.l.b16 %v75
    %v156 = vpack.c.b16 %v141, %v140
    %v157 = vpack.c.b16 %v143, %v142
    %v158 = vpack.c.b16 %v145, %v144
    %v159 = vpack.c.b16 %v147, %v146
    %v160 = vpack.c.b16 %v149, %v148
    %v161 = vpack.c.b16 %v151, %v150
    %v162 = vpack.c.b16 %v153, %v152
    %v163 = vpack.c.b16 %v155, %v154
    %172 = vmatprep.subr.bf16.mxu0 0
    %173 = vmatpush1.bf16.msra.mxu0 %v163
    %174 = vmatprep.subr.bf16.mxu0 0
    %175 = vmatpush1.bf16.msra.mxu0 %v162
    %176 = vmatprep.subr.bf16.mxu0 0
    %177 = vmatpush1.bf16.msra.mxu0 %v161
    %178 = vmatprep.subr.bf16.mxu0 0
    %179 = vmatpush1.bf16.msra.mxu0 %v160
    %180 = vmatprep.subr.bf16.mxu0 0
    %181 = vmatpush1.bf16.msra.mxu0 %v159
    %182 = vmatprep.subr.bf16.mxu0 0
    %183 = vmatpush1.bf16.msra.mxu0 %v158
    %184 = vmatprep.subr.bf16.mxu0 0
    %185 = vmatpush1.bf16.msra.mxu0 %v157
    %186 = vmatprep.subr.bf16.mxu0 0
    %187 = vmatpush1.bf16.msra.mxu0 %v156
    %188 = vmatprep.subr.bf16.mxu0 0
    %189 = vmatpush2.bf16.msra.mxu0 0
    %190 = vmatprep.subr.bf16.mxu0 0
    %191 = vmatpush2.bf16.msra.mxu0 0
    %192 = vmatprep.subr.bf16.mxu0 0
    %193 = vmatpush2.bf16.msra.mxu0 0
    %194 = vmatprep.subr.bf16.mxu0 0
    %195 = vmatpush2.bf16.msra.mxu0 0
    %196 = vmatprep.subr.bf16.mxu0 0
    %197 = vmatpush2.bf16.msra.mxu0 0
    %198 = vmatprep.subr.bf16.mxu0 0
    %199 = vmatpush2.bf16.msra.mxu0 0
    %200 = vmatprep.subr.bf16.mxu0 0
    %201 = vmatpush2.bf16.msra.mxu0 0
    %202 = vmatprep.subr.bf16.mxu0 0
    %203 = vmatpush2.bf16.msra.mxu0 0
    %204 = vmatprep.mubr.bf16.mxu0 0
    %205 = vmatmul.mubr.bf16.gmra.mxu0 %v108
    %v206 = vpop.f32.mrf.mxu0
    %v207 = vadd.f32 0.0, %v206
    %v208 = vpop.f32.mrf.mxu0
    %v209 = vpop.f32.mrf.mxu0
    %v210 = vadd.f32 0.0, %v209
    %v211 = vpop.f32.mrf.mxu0
    %212 = vmatprep.mubr.bf16.mxu0 0
    %213 = vmatmul.mubr.bf16.gmra.mxu0 %v109
    %v214 = vpop.f32.mrf.mxu0
    %v215 = vadd.f32 0.0, %v214
    %v216 = vpop.f32.mrf.mxu0
    %v217 = vpop.f32.mrf.mxu0
    %v218 = vadd.f32 0.0, %v217
    %v219 = vpop.f32.mrf.mxu0
    %220 = vmatprep.mubr.bf16.mxu0 0
    %221 = vmatmul.mubr.bf16.gmra.mxu0 %v110
    %v222 = vpop.f32.mrf.mxu0
    %v223 = vadd.f32 0.0, %v222
    %v224 = vpop.f32.mrf.mxu0
    %v225 = vpop.f32.mrf.mxu0
    %v226 = vadd.f32 0.0, %v225
    %v227 = vpop.f32.mrf.mxu0
    %228 = vmatprep.mubr.bf16.mxu0 0
    %229 = vmatmul.mubr.bf16.gmra.mxu0 %v111
    %v230 = vpop.f32.mrf.mxu0
    %v231 = vadd.f32 0.0, %v230
    %v232 = vpop.f32.mrf.mxu0
    %v233 = vpop.f32.mrf.mxu0
    %v234 = vadd.f32 0.0, %v233
    %v235 = vpop.f32.mrf.mxu0
    %236 = vmatprep.mubr.bf16.mxu0 0
    %237 = vmatmul.mubr.bf16.gmra.mxu0 %v112
    %v238 = vpop.f32.mrf.mxu0
    %v239 = vadd.f32 0.0, %v238
    %v240 = vpop.f32.mrf.mxu0
    %v241 = vpop.f32.mrf.mxu0
    %v242 = vadd.f32 0.0, %v241
    %v243 = vpop.f32.mrf.mxu0
    %244 = vmatprep.mubr.bf16.mxu0 0
    %245 = vmatmul.mubr.bf16.gmra.mxu0 %v113
    %v246 = vpop.f32.mrf.mxu0
    %v247 = vadd.f32 0.0, %v246
    %v248 = vpop.f32.mrf.mxu0
    %v249 = vpop.f32.mrf.mxu0
    %v250 = vadd.f32 0.0, %v249
    %v251 = vpop.f32.mrf.mxu0
    %252 = vmatprep.mubr.bf16.mxu0 0
    %253 = vmatmul.mubr.bf16.gmra.mxu0 %v114
    %v254 = vpop.f32.mrf.mxu0
    %v255 = vadd.f32 0.0, %v254
    %v256 = vpop.f32.mrf.mxu0
    %v257 = vpop.f32.mrf.mxu0
    %v258 = vadd.f32 0.0, %v257
    %v259 = vpop.f32.mrf.mxu0
    %260 = vmatprep.mubr.bf16.mxu0 0
    %261 = vmatmul.mubr.bf16.gmra.mxu0 %v115
    %v262 = vpop.f32.mrf.mxu0
    %v263 = vadd.f32 0.0, %v262
    %v264 = vpop.f32.mrf.mxu0
    %v265 = vpop.f32.mrf.mxu0
    %v266 = vadd.f32 0.0, %v265
    %v267 = vpop.f32.mrf.mxu0
    %268 = vdwg.mxu0
    %v269 = vadd.f32 %v207, %v210
    %v270 = vadd.f32 %v269, %v215
    %v271 = vadd.f32 %v270, %v218
    %v272 = vadd.f32 %v271, %v223
    %v273 = vadd.f32 %v272, %v226
    %v274 = vadd.f32 %v273, %v231
    %v275 = vadd.f32 %v274, %v234
    %v276 = vadd.f32 %v275, %v239
    %v277 = vadd.f32 %v276, %v242
    %v278 = vadd.f32 %v277, %v247
    %v279 = vadd.f32 %v278, %v250
    %v280 = vadd.f32 %v279, %v255
    %v281 = vadd.f32 %v280, %v258
    %v282 = vadd.f32 %v281, %v263
    %v283 = vadd.f32 %v282, %v266
    %v284 = vrot.slane %v283, 4
    %v285 = vadd.f32 %v283, %v284
    %v286 = vrot.slane %v285, 2
    %v287 = vadd.f32 %v285, %v286
    %v288 = vrot.slane %v287, 1
    %v289 = vadd.f32 %v287, %v288
    %v290 = vmul.f32 %v207, %v207
    %v291 = vmul.f32 %v210, %v210
    %v292 = vmul.f32 %v215, %v215
    %v293 = vmul.f32 %v218, %v218
    %v294 = vmul.f32 %v223, %v223
    %v295 = vmul.f32 %v226, %v226
    %v296 = vmul.f32 %v231, %v231
    %v297 = vmul.f32 %v234, %v234
    %v298 = vmul.f32 %v239, %v239
    %v299 = vmul.f32 %v242, %v242
    %v300 = vmul.f32 %v247, %v247
    %v301 = vmul.f32 %v250, %v250
    %v302 = vmul.f32 %v255, %v255
    %v303 = vmul.f32 %v258, %v258
    %v304 = vmul.f32 %v263, %v263
    %v305 = vmul.f32 %v266, %v266
    %v306 = vadd.f32 %v290, %v291
    %v307 = vadd.f32 %v306, %v292
    %v308 = vadd.f32 %v307, %v293
    %v309 = vadd.f32 %v308, %v294
    %v310 = vadd.f32 %v309, %v295
    %v311 = vadd.f32 %v310, %v296
    %v312 = vadd.f32 %v311, %v297
    %v313 = vadd.f32 %v312, %v298
    %v314 = vadd.f32 %v313, %v299
    %v315 = vadd.f32 %v314, %v300
    %v316 = vadd.f32 %v315, %v301
    %v317 = vadd.f32 %v316, %v302
    %v318 = vadd.f32 %v317, %v303
    %v319 = vadd.f32 %v318, %v304
    %v320 = vadd.f32 %v319, %v305
    %v321 = vrot.slane %v320, 4
    %v322 = vadd.f32 %v320, %v321
    %v323 = vrot.slane %v322, 2
    %v324 = vadd.f32 %v322, %v323
    %v325 = vrot.slane %v324, 1
    %v326 = vadd.f32 %v324, %v325
    %327 = vst [vmem:[#allocation7] sm:$0xff] %v289
    %328 = vst [vmem:[#allocation8] sm:$0xff] %v326
    // Predicated region
    $region18: #{tpu_custom_call.1} parent=1 // pred_check
      _
    $region19: #{tpu_custom_call.1} parent=1 // pred_check_branch
      %330 = sbr.rel (0) target = $region21
    $region20: #{tpu_custom_call.1} parent=1 // pred_region
      %s332 = ssub.s32 128, 128
      %333 = vsyncadd [#allocation4], %s332
      %s335 = sshll.u32 [#allocation7], 4
      %s336 = int_to_ptr.vmem [resolvable:$true] %s335
      %338 = dma.vmem_to_hbm [thread:$0]  %s336, 128, %s2, [#allocation4]
    $region21: #{tpu_custom_call.1} parent=1 // pred_fallthru
      _
    // Predicated region
    $region22: #{tpu_custom_call.1} parent=1 // pred_check
      _
    $region23: #{tpu_custom_call.1} parent=1 // pred_check_branch
      %340 = sbr.rel (0) target = $region25
    $region24: #{tpu_custom_call.1} parent=1 // pred_region
      %s342 = ssub.s32 128, 128
      %343 = vsyncadd [#allocation9], %s342
      %s345 = sshll.u32 [#allocation8], 4
      %s346 = int_to_ptr.vmem [resolvable:$true] %s345
      %348 = dma.vmem_to_hbm [thread:$0]  %s346, 128, %s3, [#allocation9]
    $region25: #{tpu_custom_call.1} parent=1 // pred_fallthru
      _
    // Predicated region
    $region26: #{tpu_custom_call.1} parent=1 // pred_check
      _
    $region27: #{tpu_custom_call.1} parent=1 // pred_check_branch
      %350 = sbr.rel (0) target = $region29
    $region28: #{tpu_custom_call.1} parent=1 // pred_region
      %351 = dma.done [#allocation4], 128
    $region29: #{tpu_custom_call.1} parent=1 // pred_fallthru
      _
    // Predicated region
    $region30: #{tpu_custom_call.1} parent=1 // pred_check
      _
    $region31: #{tpu_custom_call.1} parent=1 // pred_check_branch
      %353 = sbr.rel (0) target = $region33
    $region32: #{tpu_custom_call.1} parent=1 // pred_region
      %354 = dma.done [#allocation9], 128
    $region33: #{tpu_custom_call.1} parent=1 // pred_fallthru
      _
    %355 = vsyncpa [#allocation3], 1
    %356 = vsyncpa [#allocation6], 1
    %357 = vsyncpa [#allocation4], 1
    %358 = vsyncpa [#allocation9], 1

</llo_original>
